<compile_context>
chip_gen: v7x
topology: tpu7x:2x2x1
jax: 0.10.0
libtpu: 0.0.40
codegen_flags: <defaults>
</compile_context>

<pallas_src>
import functools

import jax
import jax.numpy as jnp
from jax.experimental import pallas as pl
from jax.experimental.pallas import tpu as pltpu


def _round_up(x, m):
    return ((x + m - 1) // m) * m


def _cdiv(a, b):
    return (a + b - 1) // b


def _tpu_generation():
    try:
        kind = jax.devices()[0].device_kind.lower()
    except Exception:
        return None
    if "v7" in kind or "tpu7" in kind:
        return "v7"
    if "v6" in kind:
        return "v6"
    if "v5" in kind:
        return "v5"
    return None


def _vmem_capacity_bytes(gen):
    try:
        return int(pltpu.get_tpu_info().vmem_capacity_bytes)
    except Exception:
        return (64 << 20) if gen == "v7" else (128 << 20)


def _generation_defaults(gen):
    """(tm, ti, scoped-VMEM cap) tuned per chip generation."""
    if gen == "v7":   # 996 TF/s, 3.2 TB/s, 64 MiB VMEM, 2 TCs
        return 384, 256, 56 << 20
    if gen == "v6":   # 918 TF/s, ~1.4 TB/s, 128 MiB VMEM -> biggest token tiles
        return 512, 256, 110 << 20
    if gen == "v5":   # 197 TF/s, ~0.82 TB/s, 128 MiB VMEM
        return 384, 256, 110 << 20
    return 256, 256, 48 << 20


def _pick_ti(i_pad, ti_max):
    """Largest multiple of 128 <= ti_max that divides i_pad (i_pad % 128 == 0)."""
    ti = max(128, (ti_max // 128) * 128)
    while i_pad % ti != 0:
        ti -= 128
    return ti


def fused_mlp_kernel(x_ref, wgu_ref, wd_ref, o_ref, acc_ref, *, ti):
    """One (token-tile i, intermediate-slab j) step.

    x_ref  : (tm, H)      token tile
    wgu_ref: (H, 2*ti)    fused [gate | up] weight slab (contiguous block)
    wd_ref : (ti, H)      down_proj weight slab
    o_ref  : (tm, H)      output tile (resident across the j axis)
    acc_ref: (tm, H) f32  accumulator for the down_proj reduction over I
    """
    j = pl.program_id(1)

    @pl.when(j == 0)
    def _():
        acc_ref[...] = jnp.zeros_like(acc_ref)

    x = x_ref[...]
    # One wide MXU matmul produces gate and up for this slab: (tm, 2*ti) f32.
    gu = jnp.dot(x, wgu_ref[...], preferred_element_type=jnp.float32)
    g = gu[:, :ti]
    u = gu[:, ti:]
    # SiLU(g) * u in f32 (sigmoid -> EUP slot, multiplies -> VPU slot).
    h = (g * jax.nn.sigmoid(g)) * u
    # Partial down_proj contribution of this slab, accumulated in f32.
    acc_ref[...] += jnp.dot(h.astype(wd_ref.dtype), wd_ref[...],
                            preferred_element_type=jnp.float32)

    @pl.when(j == pl.num_programs(1) - 1)
    def _():
        o_ref[...] = acc_ref[...].astype(o_ref.dtype)


def pack_fused_mlp_weights(wg, wu, wd, ti, compute_dtype=None):
    """Fuse gate/up and pre-block all weights into contiguous per-slab layouts.

    Returns:
      wgu_blocks: (nI, H, 2*ti)  [gate_slab | up_slab] per intermediate slab
      wd_blocks : (nI, ti, H)
    In production this is done once at weight-load time.
    """
    H, I = wg.shape
    if compute_dtype is not None:
        wg = wg.astype(compute_dtype)
        wu = wu.astype(compute_dtype)
        wd = wd.astype(compute_dtype)
    i_pad = _round_up(I, 128)
    assert i_pad % ti == 0
    if i_pad != I:
        # Zero columns/rows contribute exactly zero: silu(0)*0 == 0.
        wg = jnp.pad(wg, ((0, 0), (0, i_pad - I)))
        wu = jnp.pad(wu, ((0, 0), (0, i_pad - I)))
        wd = jnp.pad(wd, ((0, i_pad - I), (0, 0)))
    n = i_pad // ti
    wg_b = wg.reshape(H, n, ti).transpose(1, 0, 2)   # (nI, H, ti)
    wu_b = wu.reshape(H, n, ti).transpose(1, 0, 2)   # (nI, H, ti)
    wgu = jnp.concatenate([wg_b, wu_b], axis=-1)      # (nI, H, 2*ti)
    wd_b = wd.reshape(n, ti, H)                       # (nI, ti, H)
    return wgu, wd_b


def fused_mlp(x, wg, wu, wd, *, tm=None, ti=None, compute_dtype=jnp.bfloat16):
    """SwiGLU MLP: down_proj(silu(gate_proj(x)) * up_proj(x)).

    x       : (B, S, H)
    wg, wu  : (H, I)   (transposed nn.Linear weights, i.e. x @ W)
    wd      : (I, H)
    tm, ti  : optional overrides of the generation-tuned tile sizes.
    compute_dtype : operand dtype (bf16 default = MXU fast path); accumulation
              stays f32, output keeps x.dtype.  Pass jnp.float32 for the exact
              (slow) path, None to keep input dtypes untouched.
    """
    B, S, H = x.shape
    I = wg.shape[1]
    assert wg.shape == (H, I) and wu.shape == (H, I) and wd.shape == (I, H)

    out_dtype = x.dtype
    if compute_dtype is not None:
        x = x.astype(compute_dtype)

    gen = _tpu_generation()
    tm_d, ti_d, cap_d = _generation_defaults(gen)
    tm = tm_d if tm is None else tm
    ti = ti_d if ti is None else ti
    vmem_cap = min(cap_d, int(0.875 * _vmem_capacity_bytes(gen)))

    T = B * S
    x2 = x.reshape(T, H)

    # Only pad the sub-8 remainder (tiny); the last partial token tile is handled
    # by Pallas' masked boundary block (rows are independent across all matmuls).
    T_pad = _round_up(T, 8)
    if T_pad != T:
        x2 = jnp.pad(x2, ((0, T_pad - T), (0, 0)))

    tm = min(_round_up(max(tm, 8), 8), T_pad)
    # v7x has 2 TensorCores: make the "parallel" token axis at least 2 tiles.
    if gen == "v7" and _cdiv(T_pad, tm) == 1 and T_pad >= 16:
        tm = _round_up(_cdiv(T_pad, 2), 8)

    I_pad = _round_up(I, 128)
    ti = _pick_ti(I_pad, max(ti, 128))

    a_bytes = jnp.dtype(x2.dtype).itemsize
    w_dtype = compute_dtype if compute_dtype is not None else wg.dtype
    w_bytes = jnp.dtype(w_dtype).itemsize
    o_bytes = jnp.dtype(out_dtype).itemsize

    def est(tm_, ti_):
        x_t = tm_ * H * a_bytes                 # x tile
        o_t = tm_ * H * o_bytes                 # out tile
        wgu_t = H * 2 * ti_ * w_bytes           # fused gate|up slab
        wd_t = ti_ * H * w_bytes                # down slab
        acc = tm_ * H * 4                       # f32 accumulator
        temps = 3 * tm_ * ti_ * 4               # gu + h f32 temporaries
        return 2 * (x_t + o_t + wgu_t + wd_t) + acc + temps   # 2-deep buffering

    slack = 4 << 20
    while est(tm, ti) + slack > vmem_cap:
        if ti > 128:
            ti = _pick_ti(I_pad, ti - 128)
        elif tm > 8:
            tm = max(8, _round_up(tm // 2, 8))
        else:
            break

    n_i = I_pad // ti
    grid = (_cdiv(T_pad, tm), n_i)

    wgu, wd_b = pack_fused_mlp_weights(wg, wu, wd, ti, compute_dtype)

    vmem_limit = int(min(vmem_cap, max(est(tm, ti) + slack, 32 << 20)))

    cost = pl.CostEstimate(
        flops=6 * T_pad * H * I_pad,
        transcendentals=T_pad * I_pad,
        bytes_accessed=int(2 * T_pad * H * a_bytes
                           + 3 * H * I_pad * w_bytes * grid[0]),
    )

    out2 = pl.pallas_call(
        functools.partial(fused_mlp_kernel, ti=ti),
        out_shape=jax.ShapeDtypeStruct((T_pad, H), out_dtype),
        grid_spec=pltpu.PrefetchScalarGridSpec(
            num_scalar_prefetch=0,
            grid=grid,
            in_specs=[
                pl.BlockSpec((tm, H), lambda i, j: (i, 0)),               # x tile
                pl.BlockSpec((None, H, 2 * ti), lambda i, j: (j, 0, 0)),  # [gate|up] slab
                pl.BlockSpec((None, ti, H), lambda i, j: (j, 0, 0)),      # down slab
            ],
            out_specs=pl.BlockSpec((tm, H), lambda i, j: (i, 0)),
            scratch_shapes=[pltpu.VMEM((tm, H), jnp.float32)],
        ),
        compiler_params=pltpu.CompilerParams(
            dimension_semantics=("parallel", "arbitrary"),
            vmem_limit_bytes=vmem_limit,
        ),
        cost_estimate=cost,
    )(x2, wgu, wd_b)

    if T_pad != T:
        out2 = out2[:T]
    return out2.reshape(B, S, H)


if __name__ == "__main__":
    # ---- Test 1: toy config (hidden=32, intermediate=64), exact f32 path ----
    B, S, H, I = 2, 8, 32, 64
    kx, kg, ku, kd = jax.random.split(jax.random.PRNGKey(0), 4)
    x = jax.random.normal(kx, (B, S, H), dtype=jnp.float32)
    # normal(0, 0.02) weights, no biases (mlp_bias=False), as in _init_weights().
    wg = 0.02 * jax.random.normal(kg, (H, I), dtype=jnp.float32)
    wu = 0.02 * jax.random.normal(ku, (H, I), dtype=jnp.float32)
    wd = 0.02 * jax.random.normal(kd, (I, H), dtype=jnp.float32)

    out = jax.block_until_ready(fused_mlp(x, wg, wu, wd, compute_dtype=jnp.float32))
    ref = (jax.nn.silu(x @ wg) * (x @ wu)) @ wd
    assert out.shape == (B, S, H)
    assert jnp.allclose(out, ref, atol=2e-4, rtol=1e-3)

    # ---- Test 2: multiple token tiles (partial last block), multi I slabs, I padding ----
    B2, S2, H2, I2 = 2, 24, 128, 320   # T=48, tm=32 -> 2 tiles (last partial); I 320 -> pad 384
    k2 = jax.random.split(jax.random.PRNGKey(1), 4)
    x2 = jax.random.normal(k2[0], (B2, S2, H2), dtype=jnp.float32)
    wg2 = 0.02 * jax.random.normal(k2[1], (H2, I2), dtype=jnp.float32)
    wu2 = 0.02 * jax.random.normal(k2[2], (H2, I2), dtype=jnp.float32)
    wd2 = 0.02 * jax.random.normal(k2[3], (I2, H2), dtype=jnp.float32)

    out2 = jax.block_until_ready(
        fused_mlp(x2, wg2, wu2, wd2, tm=32, ti=128, compute_dtype=jnp.float32))
    ref2 = (jax.nn.silu(x2 @ wg2) * (x2 @ wu2)) @ wd2
    assert out2.shape == (B2, S2, H2)
    assert jnp.allclose(out2, ref2, atol=2e-3, rtol=1e-2)

    # ---- Test 3: bf16 operands (default fast path), f32 accumulation ----
    out3 = jax.block_until_ready(fused_mlp(x2, wg2, wu2, wd2, tm=32, ti=128))
    assert out3.shape == (B2, S2, H2)
    assert bool(jnp.all(jnp.isfinite(out3)))
    assert jnp.allclose(out3.astype(jnp.float32), ref2, atol=1e-2, rtol=1e-1)

    # ---- Test 4: odd token count (only the sub-8 remainder gets padded) ----
    x4 = jax.random.normal(jax.random.PRNGKey(2), (1, 5, H), dtype=jnp.float32)
    out4 = jax.block_until_ready(fused_mlp(x4, wg, wu, wd, compute_dtype=jnp.float32))
    ref4 = (jax.nn.silu(x4 @ wg) * (x4 @ wu)) @ wd
    assert out4.shape == (1, 5, H)
    assert jnp.allclose(out4, ref4, atol=2e-4, rtol=1e-3)

    print("KERNEL_OK")
</pallas_src>

<mosaic_0001>
module attributes {stable_mosaic.version = 11 : i64} {
  func.func @fused_mlp_kernel(%arg0: i32, %arg1: i32, %arg2: memref<16x32xf32, #tpu.memory_space<vmem>>, %arg3: memref<1x32x256xf32, #tpu.memory_space<vmem>>, %arg4: memref<1x128x32xf32, #tpu.memory_space<vmem>>, %arg5: memref<16x32xf32, #tpu.memory_space<vmem>>, %arg6: memref<16x32xf32, #tpu.memory_space<vmem>>) attributes {dimension_semantics = [#tpu.dimension_semantics<parallel>, #tpu.dimension_semantics<arbitrary>], iteration_bounds = array<i64: 1, 1>, scalar_prefetch = 0 : i64, scratch_operands = 1 : i64, tpu.core_type = #tpu.core_type<tc>, window_params = [{transform_indices = @transform_0, window_bounds = array<i64: 16, 32>}, {transform_indices = @transform_1, window_bounds = array<i64: 1, 32, 256>}, {transform_indices = @transform_2, window_bounds = array<i64: 1, 128, 32>}, {transform_indices = @transform_3, window_bounds = array<i64: 16, 32>}]} {
    %c0_i32 = arith.constant 0 : i32
    %0 = arith.cmpi eq, %arg1, %c0_i32 : i32
    %1 = arith.extui %0 : i1 to i32
    %c0_i32_0 = arith.constant 0 : i32
    %2 = arith.cmpi ne, %1, %c0_i32_0 : i32
    scf.if %2 {
      %cst_16 = arith.constant 0.000000e+00 : f32
      %25 = vector.broadcast %cst_16 : f32 to vector<16x32xf32>
      %c0_17 = arith.constant 0 : index
      %c0_18 = arith.constant 0 : index
      %26 = vector.load %arg6[%c0_17, %c0_18] : memref<16x32xf32, #tpu.memory_space<vmem>>, vector<16x32xf32>
      tpu.vector_store %arg6[%c0_17, %c0_18], %25 {strides = array<i32>} : memref<16x32xf32, #tpu.memory_space<vmem>>, vector<16x32xf32>,
    } else {
    }
    %c0 = arith.constant 0 : index
    %c0_1 = arith.constant 0 : index
    %3 = vector.load %arg2[%c0, %c0_1] : memref<16x32xf32, #tpu.memory_space<vmem>>, vector<16x32xf32>
    %c0_2 = arith.constant 0 : index
    %c0_3 = arith.constant 0 : index
    %c0_4 = arith.constant 0 : index
    %4 = vector.load %arg3[%c0_2, %c0_3, %c0_4] : memref<1x32x256xf32, #tpu.memory_space<vmem>>, vector<1x32x256xf32>
    %5 = vector.shape_cast %4 : vector<1x32x256xf32> to vector<32x256xf32>
    %cst = arith.constant dense<0.000000e+00> : vector<16x256xf32>
    %6 = tpu.matmul %3, %5, %cst {dimension_numbers = #tpu.dot_dimension_numbers<[1], [0], [0], [1], [0, 0, 1, 1], [], []>} : vector<16x32xf32>, vector<32x256xf32>, vector<16x256xf32> -> vector<16x256xf32>
    %7 = vector.extract_strided_slice %6 {offsets = [0, 0], sizes = [16, 128], strides = [1, 1]} : vector<16x256xf32> to vector<16x128xf32>
    %8 = vector.extract_strided_slice %6 {offsets = [0, 128], sizes = [16, 128], strides = [1, 1]} : vector<16x256xf32> to vector<16x128xf32>
    %9 = arith.negf %7 : vector<16x128xf32>
    %10 = math.exp %9 : vector<16x128xf32>
    %cst_5 = arith.constant 1.000000e+00 : f32
    %11 = vector.broadcast %cst_5 : f32 to vector<16x128xf32>
    %12 = arith.addf %11, %10 : vector<16x128xf32>
    %13 = arith.divf %11, %12 : vector<16x128xf32>
    %14 = arith.mulf %7, %13 : vector<16x128xf32>
    %15 = arith.mulf %14, %8 : vector<16x128xf32>
    %c0_6 = arith.constant 0 : index
    %c0_7 = arith.constant 0 : index
    %16 = vector.load %arg6[%c0_6, %c0_7] : memref<16x32xf32, #tpu.memory_space<vmem>>, vector<16x32xf32>
    %c0_8 = arith.constant 0 : index
    %c0_9 = arith.constant 0 : index
    %c0_10 = arith.constant 0 : index
    %17 = vector.load %arg4[%c0_8, %c0_9, %c0_10] : memref<1x128x32xf32, #tpu.memory_space<vmem>>, vector<1x128x32xf32>
    %18 = vector.shape_cast %17 : vector<1x128x32xf32> to vector<128x32xf32>
    %cst_11 = arith.constant dense<0.000000e+00> : vector<16x32xf32>
    %19 = tpu.matmul %15, %18, %cst_11 {dimension_numbers = #tpu.dot_dimension_numbers<[1], [0], [0], [1], [0, 0, 1, 1], [], []>} : vector<16x128xf32>, vector<128x32xf32>, vector<16x32xf32> -> vector<16x32xf32>
    %20 = arith.addf %16, %19 : vector<16x32xf32>
    %c0_12 = arith.constant 0 : index
    %c0_13 = arith.constant 0 : index
    %21 = vector.load %arg6[%c0_12, %c0_13] : memref<16x32xf32, #tpu.memory_space<vmem>>, vector<16x32xf32>
    tpu.vector_store %arg6[%c0_12, %c0_13], %20 {strides = array<i32>} : memref<16x32xf32, #tpu.memory_space<vmem>>, vector<16x32xf32>,
    %c0_i32_14 = arith.constant 0 : i32
    %22 = arith.cmpi eq, %arg1, %c0_i32_14 : i32
    %23 = arith.extui %22 : i1 to i32
    %c0_i32_15 = arith.constant 0 : i32
    %24 = arith.cmpi ne, %23, %c0_i32_15 : i32
    scf.if %24 {
      %c0_16 = arith.constant 0 : index
      %c0_17 = arith.constant 0 : index
      %25 = vector.load %arg6[%c0_16, %c0_17] : memref<16x32xf32, #tpu.memory_space<vmem>>, vector<16x32xf32>
      %c0_18 = arith.constant 0 : index
      %c0_19 = arith.constant 0 : index
      %26 = vector.load %arg5[%c0_18, %c0_19] : memref<16x32xf32, #tpu.memory_space<vmem>>, vector<16x32xf32>
      tpu.vector_store %arg5[%c0_18, %c0_19], %25 {strides = array<i32>} : memref<16x32xf32, #tpu.memory_space<vmem>>, vector<16x32xf32>,
    } else {
    }
    return
  }
  func.func @transform_0(%arg0: i32, %arg1: i32) -> (i32, i32) {
    %c0_i32 = arith.constant 0 : i32
    %c0_i32_0 = arith.constant 0 : i32
    return %arg0, %c0_i32 : i32, i32
  }
  func.func @transform_1(%arg0: i32, %arg1: i32) -> (i32, i32, i32) {
    %c0_i32 = arith.constant 0 : i32
    %c0_i32_0 = arith.constant 0 : i32
    %c0_i32_1 = arith.constant 0 : i32
    return %arg1, %c0_i32, %c0_i32_0 : i32, i32, i32
  }
  func.func @transform_2(%arg0: i32, %arg1: i32) -> (i32, i32, i32) {
    %c0_i32 = arith.constant 0 : i32
    %c0_i32_0 = arith.constant 0 : i32
    %c0_i32_1 = arith.constant 0 : i32
    return %arg1, %c0_i32, %c0_i32_0 : i32, i32, i32
  }
  func.func @transform_3(%arg0: i32, %arg1: i32) -> (i32, i32) {
    %c0_i32 = arith.constant 0 : i32
    %c0_i32_0 = arith.constant 0 : i32
    return %arg0, %c0_i32 : i32, i32
  }
}

</mosaic_0001>

<llo_original>
// kernel: tpu_custom_call.1
$region0: #{tpu_custom_call.1}
  #allocation0 [shape = 'u32[]', space=smem, size = 0x4, offset = 0x4, fixed_abs, tag = 'smem constant byte address 0x4 - core index']
  #allocation1 [shape = 'u32[144,128]{1,0:T(1,128)}', space=vmem, size = 0x12000, scoped, tag = 'internal scratch']
  #allocation2 [shape = 'f32[16,32]{1,0:T(8,128)}', space=vmem, size = 0x2000, scoped, tag = 'scratch operand']
  %s0 = inlined_call_operand.vmem [shape: f32[16,32], index: 0, kind: input, shape index: {}]
  %s1 = inlined_call_operand.vmem [shape: f32[1,32,256], index: 1, kind: input, shape index: {}]
  %s2 = inlined_call_operand.vmem [shape: f32[1,128,32], index: 2, kind: input, shape index: {}]
  %s3 = inlined_call_operand.hbm [shape: f32[16,32], index: 3, kind: output, shape index: {}]
  %s4 = sld [smem:[#allocation0]]
  $region30: #{tpu_custom_call.1} parent=0
    _
  %s6 = ssub.s32 1, %s4
  %s7 = scalar_select 0, %s6, %s4
  $region1: #{tpu_custom_call.1} parent=0
    #allocation3 [shape = 'u8[8192]{0}', space=vmem, size = 0x2000, scoped, tag = 'output window, operand 0, single buffered']
    #allocation4 [shape = 's32[1]{0}', space=sflag, size = 0x4, scoped, tag = 'scoped memory for tpu_custom_call.1']
    %8 = vsyncpa [#allocation4], 0
    // Predicated region
    $region2: #{tpu_custom_call.1} parent=1 // pred_check
      _
    $region3: #{tpu_custom_call.1} parent=1 // pred_check_branch
      %10 = sbr.rel (0) target = $region5
    $region4: #{tpu_custom_call.1} parent=1 // pred_region
      _
    $region5: #{tpu_custom_call.1} parent=1 // pred_fallthru
      _
    // Predicated region
    $region6: #{tpu_custom_call.1} parent=1 // pred_check
      _
    $region7: #{tpu_custom_call.1} parent=1 // pred_check_branch
      %12 = sbr.rel (0) target = $region9
    $region8: #{tpu_custom_call.1} parent=1 // pred_region
      _
    $region9: #{tpu_custom_call.1} parent=1 // pred_fallthru
      _
    // Predicated region
    $region10: #{tpu_custom_call.1} parent=1 // pred_check
      _
    $region11: #{tpu_custom_call.1} parent=1 // pred_check_branch
      %14 = sbr.rel (0) target = $region13
    $region12: #{tpu_custom_call.1} parent=1 // pred_region
      _
    $region13: #{tpu_custom_call.1} parent=1 // pred_fallthru
      _
    %p15 = scmp.eq.s32.totalorder 0, 0
    // Predicated region
    $region14: #{tpu_custom_call.1} parent=1 // pred_check
      %p16 = pneg %p15
    $region15: #{tpu_custom_call.1} parent=1 // pred_check_branch
      %18 = sbr.rel (%p16) target = $region17
    $region16: #{tpu_custom_call.1} parent=1 // pred_region
      %vm19 = vcmask 261120
      %20 = vst.msk [vmem:[#allocation2] sm:$0xff] %vm19, 0.0
      %21 = vst.msk [vmem:[#allocation2 + $0x8] sm:$0xff] %vm19, 0.0
    $region17: #{tpu_custom_call.1} parent=1 // pred_fallthru
      _
    %v22 = vld [vmem:[%s0] sm:$0xff]
    %v23 = vld [vmem:[%s0 + $0x8] sm:$0xff]
    %v24 = vld [vmem:[%s1] sm:$0xff]
    %v25 = vld [vmem:[%s1 + $0x8] sm:$0xff]
    %v26 = vld [vmem:[%s1 + $0x10] sm:$0xff]
    %v27 = vld [vmem:[%s1 + $0x18] sm:$0xff]
    %v28 = vld [vmem:[%s1 + $0x20] sm:$0xff]
    %v29 = vld [vmem:[%s1 + $0x28] sm:$0xff]
    %v30 = vld [vmem:[%s1 + $0x30] sm:$0xff]
    %v31 = vld [vmem:[%s1 + $0x38] sm:$0xff]
    %vm32 = vcmask 261120
    %v34 = vsel %vm32, %v22, 0
    %v37 = vsel %vm32, %v23, 0
    %39 = vmatprep.subr.mxu0 %v25
    %40 = vmatpush1.msra.mxu0 %v24
    %41 = vmatprep.subr.mxu0 %v27
    %42 = vmatpush1.msra.mxu0 %v26
    %43 = vmatprep.subr.mxu0 %v29
    %44 = vmatpush1.msra.mxu0 %v28
    %45 = vmatprep.subr.mxu0 %v31
    %46 = vmatpush1.msra.mxu0 %v30
    %47 = vmatprep.subr.mxu0 0.0
    %48 = vmatpush1.msra.mxu0 0.0
    %49 = vmatprep.subr.mxu0 0.0
    %50 = vmatpush1.msra.mxu0 0.0
    %51 = vmatprep.subr.mxu0 0.0
    %52 = vmatpush1.msra.mxu0 0.0
    %53 = vmatprep.subr.mxu0 0.0
    %54 = vmatpush1.msra.mxu0 0.0
    %55 = vmatprep.subr.mxu0 0.0
    %56 = vmatpush1.msra.mxu0 0.0
    %57 = vmatprep.subr.mxu0 0.0
    %58 = vmatpush1.msra.mxu0 0.0
    %59 = vmatprep.subr.mxu0 0.0
    %60 = vmatpush1.msra.mxu0 0.0
    %61 = vmatprep.subr.mxu0 0.0
    %62 = vmatpush1.msra.mxu0 0.0
    %63 = vmatprep.subr.mxu0 0.0
    %64 = vmatpush1.msra.mxu0 0.0
    %65 = vmatprep.subr.mxu0 0.0
    %66 = vmatpush1.msra.mxu0 0.0
    %67 = vmatprep.subr.mxu0 0.0
    %68 = vmatpush1.msra.mxu0 0.0
    %69 = vmatprep.subr.mxu0 0.0
    %70 = vmatpush1.msra.mxu0 0.0
    %71 = vmatprep.subr.mxu0 0.0
    %72 = vmatpush1.msra.mxu0 0.0
    %73 = vmatprep.subr.mxu0 0.0
    %74 = vmatpush1.msra.mxu0 0.0
    %75 = vmatprep.subr.mxu0 0.0
    %76 = vmatpush1.msra.mxu0 0.0
    %77 = vmatprep.subr.mxu0 0.0
    %78 = vmatpush1.msra.mxu0 0.0
    %79 = vmatprep.subr.mxu0 0.0
    %80 = vmatpush1.msra.mxu0 0.0
    %81 = vmatprep.subr.mxu0 0.0
    %82 = vmatpush1.msra.mxu0 0.0
    %83 = vmatprep.subr.mxu0 0.0
    %84 = vmatpush1.msra.mxu0 0.0
    %85 = vmatprep.subr.mxu0 0.0
    %86 = vmatpush1.msra.mxu0 0.0
    %87 = vmatprep.subr.mxu0 0.0
    %88 = vmatpush1.msra.mxu0 0.0
    %89 = vmatprep.subr.mxu0 0.0
    %90 = vmatpush1.msra.mxu0 0.0
    %91 = vmatprep.subr.mxu0 0.0
    %92 = vmatpush1.msra.mxu0 0.0
    %93 = vmatprep.subr.mxu0 0.0
    %94 = vmatpush1.msra.mxu0 0.0
    %95 = vmatprep.subr.mxu0 0.0
    %96 = vmatpush1.msra.mxu0 0.0
    %97 = vmatprep.subr.mxu0 0.0
    %98 = vmatpush1.msra.mxu0 0.0
    %99 = vmatprep.subr.mxu0 0.0
    %100 = vmatpush1.msra.mxu0 0.0
    %101 = vmatprep.subr.mxu0 0.0
    %102 = vmatpush1.msra.mxu0 0.0
    %103 = vmatprep.mubr.f32.mxu0 0.0
    %104 = vmatmul.mubr.f32.gmra.mrb[0].mxu0 %v34
    %v105 = vpop.f32.mrb[0].mxu0
    %v106 = vadd.f32 0.0, %v105
    %v107 = vpop.f32.mrb[0].mxu0
    %v108 = vadd.f32 0.0, %v107
    %109 = vmatprep.mubr.f32.mxu0 0.0
    %110 = vmatmul.mubr.f32.gmra.mrb[0].mxu0 %v37
    %v111 = vpop.f32.mrb[0].mxu0
    %v112 = vadd.f32 0.0, %v111
    %v113 = vpop.f32.mrb[0].mxu0
    %v114 = vadd.f32 0.0, %v113
    %115 = vdwg.mxu0
    %v116 = vxor.u32 %v106, 2147483648
    %v117 = vxor.u32 %v112, 2147483648
    %v118 = vmul.f32 %v116, 1.442695
    %v119 = vpow.pop %v118
    %v120 = vmul.f32 %v117, 1.442695
    %v121 = vpow.pop %v120
    %v122 = vadd.f32 %v119, 1.0
    %v123 = vadd.f32 %v121, 1.0
    %v124 = vrcp.pop %v122
    %v125 = vmul.f32 1.0, %v124
    %v126 = vrcp.pop %v123
    %v127 = vmul.f32 1.0, %v126
    %v128 = vmul.f32 %v106, %v125
    %v129 = vmul.f32 %v112, %v127
    %v130 = vmul.f32 %v128, %v108
    %v131 = vmul.f32 %v129, %v114
    %v132 = vld [vmem:[#allocation2] sm:$0xff]
    %v133 = vld [vmem:[#allocation2 + $0x8] sm:$0xff]
    %v134 = vld [vmem:[%s2] sm:$0xff]
    %v135 = vld [vmem:[%s2 + $0x8] sm:$0xff]
    %v136 = vld [vmem:[%s2 + $0x10] sm:$0xff]
    %v137 = vld [vmem:[%s2 + $0x18] sm:$0xff]
    %v138 = vld [vmem:[%s2 + $0x20] sm:$0xff]
    %v139 = vld [vmem:[%s2 + $0x28] sm:$0xff]
    %v140 = vld [vmem:[%s2 + $0x30] sm:$0xff]
    %v141 = vld [vmem:[%s2 + $0x38] sm:$0xff]
    %v142 = vld [vmem:[%s2 + $0x40] sm:$0xff]
    %v143 = vld [vmem:[%s2 + $0x48] sm:$0xff]
    %v144 = vld [vmem:[%s2 + $0x50] sm:$0xff]
    %v145 = vld [vmem:[%s2 + $0x58] sm:$0xff]
    %v146 = vld [vmem:[%s2 + $0x60] sm:$0xff]
    %v147 = vld [vmem:[%s2 + $0x68] sm:$0xff]
    %v148 = vld [vmem:[%s2 + $0x70] sm:$0xff]
    %v149 = vld [vmem:[%s2 + $0x78] sm:$0xff]
    %150 = vmatprep.subr.mxu0 0.0
    %151 = vmatpush1.msra.mxu0 %v134
    %152 = vmatprep.subr.mxu0 0.0
    %153 = vmatpush1.msra.mxu0 %v135
    %154 = vmatprep.subr.mxu0 0.0
    %155 = vmatpush1.msra.mxu0 %v136
    %156 = vmatprep.subr.mxu0 0.0
    %157 = vmatpush1.msra.mxu0 %v137
    %158 = vmatprep.subr.mxu0 0.0
    %159 = vmatpush1.msra.mxu0 %v138
    %160 = vmatprep.subr.mxu0 0.0
    %161 = vmatpush1.msra.mxu0 %v139
    %162 = vmatprep.subr.mxu0 0.0
    %163 = vmatpush1.msra.mxu0 %v140
    %164 = vmatprep.subr.mxu0 0.0
    %165 = vmatpush1.msra.mxu0 %v141
    %166 = vmatprep.subr.mxu0 0.0
    %167 = vmatpush1.msra.mxu0 %v142
    %168 = vmatprep.subr.mxu0 0.0
    %169 = vmatpush1.msra.mxu0 %v143
    %170 = vmatprep.subr.mxu0 0.0
    %171 = vmatpush1.msra.mxu0 %v144
    %172 = vmatprep.subr.mxu0 0.0
    %173 = vmatpush1.msra.mxu0 %v145
    %174 = vmatprep.subr.mxu0 0.0
    %175 = vmatpush1.msra.mxu0 %v146
    %176 = vmatprep.subr.mxu0 0.0
    %177 = vmatpush1.msra.mxu0 %v147
    %178 = vmatprep.subr.mxu0 0.0
    %179 = vmatpush1.msra.mxu0 %v148
    %180 = vmatprep.subr.mxu0 0.0
    %181 = vmatpush1.msra.mxu0 %v149
    %182 = vmatprep.subr.mxu0 0.0
    %183 = vmatpush1.msra.mxu0 0.0
    %184 = vmatprep.subr.mxu0 0.0
    %185 = vmatpush1.msra.mxu0 0.0
    %186 = vmatprep.subr.mxu0 0.0
    %187 = vmatpush1.msra.mxu0 0.0
    %188 = vmatprep.subr.mxu0 0.0
    %189 = vmatpush1.msra.mxu0 0.0
    %190 = vmatprep.subr.mxu0 0.0
    %191 = vmatpush1.msra.mxu0 0.0
    %192 = vmatprep.subr.mxu0 0.0
    %193 = vmatpush1.msra.mxu0 0.0
    %194 = vmatprep.subr.mxu0 0.0
    %195 = vmatpush1.msra.mxu0 0.0
    %196 = vmatprep.subr.mxu0 0.0
    %197 = vmatpush1.msra.mxu0 0.0
    %198 = vmatprep.subr.mxu0 0.0
    %199 = vmatpush1.msra.mxu0 0.0
    %200 = vmatprep.subr.mxu0 0.0
    %201 = vmatpush1.msra.mxu0 0.0
    %202 = vmatprep.subr.mxu0 0.0
    %203 = vmatpush1.msra.mxu0 0.0
    %204 = vmatprep.subr.mxu0 0.0
    %205 = vmatpush1.msra.mxu0 0.0
    %206 = vmatprep.subr.mxu0 0.0
    %207 = vmatpush1.msra.mxu0 0.0
    %208 = vmatprep.subr.mxu0 0.0
    %209 = vmatpush1.msra.mxu0 0.0
    %210 = vmatprep.subr.mxu0 0.0
    %211 = vmatpush1.msra.mxu0 0.0
    %212 = vmatprep.subr.mxu0 0.0
    %213 = vmatpush1.msra.mxu0 0.0
    %214 = vmatprep.mubr.f32.mxu0 0.0
    %215 = vmatmul.mubr.f32.gmra.mrb[0].mxu0 %v130
    %v216 = vpop.f32.mrb[0].mxu0
    %v217 = vadd.f32 0.0, %v216
    %v218 = vpop.f32.mrb[0].mxu0
    %219 = vmatprep.mubr.f32.mxu0 0.0
    %220 = vmatmul.mubr.f32.gmra.mrb[0].mxu0 %v131
    %v221 = vpop.f32.mrb[0].mxu0
    %v222 = vadd.f32 0.0, %v221
    %v223 = vpop.f32.mrb[0].mxu0
    %224 = vdwg.mxu0
    %v225 = vadd.f32 %v132, %v217
    %v226 = vadd.f32 %v133, %v222
    %227 = vst.msk [vmem:[#allocation2] sm:$0xff] %vm32, %v225
    %228 = vst.msk [vmem:[#allocation2 + $0x8] sm:$0xff] %vm32, %v226
    // Predicated region
    $region18: #{tpu_custom_call.1} parent=1 // pred_check
      %p229 = pneg %p15
    $region19: #{tpu_custom_call.1} parent=1 // pred_check_branch
      %231 = sbr.rel (%p229) target = $region21
    $region20: #{tpu_custom_call.1} parent=1 // pred_region
      %v232 = vld [vmem:[#allocation2] sm:$0xff]
      %v233 = vld [vmem:[#allocation2 + $0x8] sm:$0xff]
      %234 = vst.msk [vmem:[#allocation3] sm:$0xff] %vm32, %v232
      %235 = vst.msk [vmem:[#allocation3 + $0x8] sm:$0xff] %vm32, %v233
    $region21: #{tpu_custom_call.1} parent=1 // pred_fallthru
      _
    // Predicated region
    $region22: #{tpu_custom_call.1} parent=1 // pred_check
      _
    $region23: #{tpu_custom_call.1} parent=1 // pred_check_branch
      %237 = sbr.rel (0) target = $region25
    $region24: #{tpu_custom_call.1} parent=1 // pred_region
      %s239 = ssub.s32 256, 256
      %240 = vsyncadd [#allocation4], %s239
      %s241 = sshll.u32 [#allocation3], 4
      %s242 = int_to_ptr.vmem [resolvable:$true] %s241
      %247 = dma.vmem_to_hbm [thread:$0]  %s242, 256, %s3, [#allocation4], 128, 128, 8
    $region25: #{tpu_custom_call.1} parent=1 // pred_fallthru
      _
    // Predicated region
    $region26: #{tpu_custom_call.1} parent=1 // pred_check
      _
    $region27: #{tpu_custom_call.1} parent=1 // pred_check_branch
      %249 = sbr.rel (0) target = $region29
    $region28: #{tpu_custom_call.1} parent=1 // pred_region
      %250 = dma.done [#allocation4], 256
    $region29: #{tpu_custom_call.1} parent=1 // pred_fallthru
      _
    %251 = vsyncpa [#allocation4], 1

</llo_original>
